<compile_context>
chip_gen: v7x
topology: tpu7x:2x2x1
jax: 0.10.0
libtpu: 0.0.40
codegen_flags: <defaults>
</compile_context>

<pallas_src>
import functools
import math

import jax
import jax.numpy as jnp
from jax.experimental import pallas as pl
from jax.experimental.pallas import tpu as pltpu

_BN_EPS = 1e-5


@functools.lru_cache(maxsize=None)
def _vmem_limit():
    """Generation-aware scoped-VMEM limit (conservative 32 MiB fallback)."""
    try:
        cap = int(pltpu.get_tpu_info().vmem_capacity_bytes)
        return int(min(max(cap // 2, 32 * 1024 * 1024), 100 * 1024 * 1024))
    except Exception:
        return 32 * 1024 * 1024


# ---------------------------------------------------------------------------
# Kernel 1: pairwise knn scores  2<xi,xj> - |xi|^2 - |xj|^2, tiled over queries
# ---------------------------------------------------------------------------
def _knn_score_kernel(xq_ref, xk_ref, sqc_ref, sqr_ref, o_ref):
    xq = xq_ref[0]                      # [tq, 3]
    xk = xk_ref[0]                      # [3, N]
    # K=3 contraction on the VPU (too narrow to feed the MXU usefully).
    inner = (xq[:, 0:1] * xk[0:1, :] + xq[:, 1:2] * xk[1:2, :]
             + xq[:, 2:3] * xk[2:3, :])
    o_ref[0] = 2.0 * inner - sqc_ref[0] - sqr_ref[0]


def knn_indices(xyz, k, tq=128):
    """xyz: [B, 3, N] -> idx [B, N, k] of the k nearest points (incl. self)."""
    B, _, N = xyz.shape
    xyz = xyz.astype(jnp.float32)
    x_nm = jnp.transpose(xyz, (0, 2, 1))            # [B, N, 3]  (tiny transpose)
    sq = jnp.sum(xyz * xyz, axis=1)                 # [B, N]
    nq = -(-N // tq)
    Nq = nq * tq
    xq, sqc = x_nm, sq[:, :, None]
    if Nq != N:                                     # pad the query axis only
        xq = jnp.pad(xq, ((0, 0), (0, Nq - N), (0, 0)))
        sqc = jnp.pad(sqc, ((0, 0), (0, Nq - N), (0, 0)))
    scores = pl.pallas_call(
        _knn_score_kernel,
        out_shape=jax.ShapeDtypeStruct((B, Nq, N), jnp.float32),
        grid=(B, nq),
        in_specs=[
            pl.BlockSpec((1, tq, 3), lambda b, t: (b, t, 0)),
            pl.BlockSpec((1, 3, N), lambda b, t: (b, 0, 0)),
            pl.BlockSpec((1, tq, 1), lambda b, t: (b, t, 0)),
            pl.BlockSpec((1, 1, N), lambda b, t: (b, 0, 0)),
        ],
        out_specs=pl.BlockSpec((1, tq, N), lambda b, t: (b, t, 0)),
        compiler_params=pltpu.CompilerParams(
            dimension_semantics=("parallel", "arbitrary"),
            vmem_limit_bytes=_vmem_limit()),
    )(xq, xyz, sqc, sq[:, None, :])
    scores = scores[:, :N, :]
    # TODO(synk): top-k / sort has no clean Pallas TPU equivalent; done in XLA.
    return jax.lax.top_k(scores, k)[1].astype(jnp.int32)


# ---------------------------------------------------------------------------
# Kernel 2: fused neighbour gather + edge MLPs (+BN+ReLU) + max over k
#           + merged conv_down1/2 + ReLU       (channel-major, lane-dense)
# ---------------------------------------------------------------------------
def _edge_encode_kernel(xf_ref, cen_ref, idx_ref, wn_ref, wc_ref, b_ref, wd_ref,
                        fenc_ref, f12_ref, *, tn, k, n_src, chunk):
    cin = xf_ref.shape[1]
    ktn = k * tn
    idx2d = idx_ref[0]                                   # [k, tn] int32 (k-major)
    idx_rows = [idx2d[j][None, :] for j in range(k)]
    base_iota = jax.lax.broadcasted_iota(jnp.int32, (chunk, tn), 0)

    # Neighbour gather: one-hot (exact 0/1) bf16 MXU matmul, chunked over the
    # source-point axis so VMEM stays bounded for any N.  Output is the fully
    # lane-dense [cin, k*tn] slab; the edge tensors never touch HBM.
    nbr = None
    for c in range(n_src // chunk):
        rows = base_iota + c * chunk
        sel = jnp.concatenate(
            [(rows == idx_rows[j]).astype(jnp.float32).astype(jnp.bfloat16)
             for j in range(k)], axis=1)                 # [chunk, k*tn] bf16
        part = jnp.dot(xf_ref[0, :, c * chunk:(c + 1) * chunk], sel,
                       preferred_element_type=jnp.float32)
        nbr = part if nbr is None else nbr + part        # [cin, k*tn] f32

    # Edge MLPs: conv(cat[nbr - cen, cen]) == Wn @ nbr + Wc @ cen + b, with the
    # xyz / feat convs merged into one block-diagonal weight (single MXU pass).
    a = jnp.dot(wn_ref[...], nbr, preferred_element_type=jnp.float32)    # [C, k*tn]
    cen = cen_ref[0].astype(jnp.float32)                                 # [cin, tn]
    cpart = jnp.dot(wc_ref[...], cen,
                    preferred_element_type=jnp.float32) + b_ref[...]     # [C, tn]

    # max over k neighbours: k static tile-aligned lane slices, pure VPU.
    fe = jnp.maximum(a[:, 0:tn] + cpart, 0.0)
    for j in range(1, k):
        fe = jnp.maximum(fe, jnp.maximum(a[:, j * tn:(j + 1) * tn] + cpart, 0.0))

    fenc_ref[0] = fe                                                     # [C, tn]
    # conv_down1 / conv_down2 merged into one [2*C/8, C] matmul + ReLU.
    f12_ref[0] = jnp.maximum(
        jnp.dot(wd_ref[...], fe, preferred_element_type=jnp.float32), 0.0)


def edge_encode(xf_bf, idx_km, q, *, k, tn, chunk):
    B, cin_p, Np = xf_bf.shape
    C = q['wn'].shape[0]
    c8x2 = q['wd'].shape[0]
    nt = Np // tn
    kern = functools.partial(_edge_encode_kernel, tn=tn, k=k, n_src=Np, chunk=chunk)
    return pl.pallas_call(
        kern,
        out_shape=(jax.ShapeDtypeStruct((B, C, Np), jnp.float32),
                   jax.ShapeDtypeStruct((B, c8x2, Np), jnp.float32)),
        grid=(B, nt),
        in_specs=[
            pl.BlockSpec((1, cin_p, Np), lambda b, t: (b, 0, 0)),   # full source pts
            pl.BlockSpec((1, cin_p, tn), lambda b, t: (b, 0, t)),   # centre tile
            pl.BlockSpec((1, k, tn), lambda b, t: (b, 0, t)),       # lane-dense idx
            pl.BlockSpec((C, cin_p), lambda b, t: (0, 0)),
            pl.BlockSpec((C, cin_p), lambda b, t: (0, 0)),
            pl.BlockSpec((C, 1), lambda b, t: (0, 0)),
            pl.BlockSpec((c8x2, C), lambda b, t: (0, 0)),
        ],
        out_specs=(pl.BlockSpec((1, C, tn), lambda b, t: (b, 0, t)),
                   pl.BlockSpec((1, c8x2, tn), lambda b, t: (b, 0, t))),
        compiler_params=pltpu.CompilerParams(
            dimension_semantics=("parallel", "arbitrary"),
            vmem_limit_bytes=_vmem_limit()),
    )(xf_bf, xf_bf, idx_km, q['wn'], q['wc'], q['b'], q['wd'])


# ---------------------------------------------------------------------------
# Kernel 3: sqrt(channel x space outer) + residuals + conv_up/BN/ReLU + Mish
# ---------------------------------------------------------------------------
def _fuse_kernel(fenc_ref, f12_ref, chan_ref, space_ref, wu_ref, bu_ref, o_ref,
                 *, c8):
    f1 = f12_ref[0, :c8, :]                                              # [c8, tn]
    f2 = f12_ref[0, c8:, :]
    fin = jnp.sqrt(chan_ref[...] * space_ref[...] + 1e-12) + f1 + f2     # [c8, tn]
    up = jnp.maximum(
        jnp.dot(wu_ref[...], fin, preferred_element_type=jnp.float32)
        + bu_ref[...], 0.0)                                              # [C, tn]
    x = fenc_ref[0] - up
    # Mish with one transcendental: tanh(softplus(x)) = (t^2+2t)/(t^2+2t+2), t=e^x.
    # (Matches PyTorch's softplus threshold of 20: for x > 20, mish(x) ~= x.)
    t = jnp.exp(jnp.minimum(x, 20.0))
    num = t * (t + 2.0)
    mish = x * num * pl.reciprocal(num + 2.0, approx=True)
    o_ref[0] = jnp.where(x > 20.0, x, mish)


def fuse_final(fenc, f12, chan, space, wu, bu, *, tn):
    B, C, Np = fenc.shape
    c8 = chan.shape[0]
    nt = Np // tn
    kern = functools.partial(_fuse_kernel, c8=c8)
    return pl.pallas_call(
        kern,
        out_shape=jax.ShapeDtypeStruct((B, C, Np), jnp.float32),
        grid=(B, nt),
        in_specs=[
            pl.BlockSpec((1, C, tn), lambda b, t: (b, 0, t)),
            pl.BlockSpec((1, 2 * c8, tn), lambda b, t: (b, 0, t)),
            pl.BlockSpec((c8, 1), lambda b, t: (0, 0)),
            pl.BlockSpec((1, tn), lambda b, t: (0, t)),
            pl.BlockSpec((C, c8), lambda b, t: (0, 0)),
            pl.BlockSpec((C, 1), lambda b, t: (0, 0)),
        ],
        out_specs=pl.BlockSpec((1, C, tn), lambda b, t: (b, 0, t)),
        compiler_params=pltpu.CompilerParams(
            dimension_semantics=("parallel", "parallel"),
            vmem_limit_bytes=_vmem_limit()),
    )(fenc, f12, chan, space, wu, bu)


# ---------------------------------------------------------------------------
# Parameters (PyTorch-default-style init) and BN/bias folding
# ---------------------------------------------------------------------------
def _uniform(key, shape, bound):
    return jax.random.uniform(key, shape, jnp.float32, -bound, bound)


def local_fuse_init(key, input_features_dim):
    c = input_features_dim
    ch, c8 = c // 2, c // 8
    ks = jax.random.split(key, 20)
    p = {
        # 1x1 conv weights stored channel-major [out, in] (torch weight[:, :, 0, 0]).
        'w_mlp1': _uniform(ks[0], (ch, 6), 1.0 / math.sqrt(6.0)),
        'b_mlp1': _uniform(ks[1], (ch,), 1.0 / math.sqrt(6.0)),
        'w_mlp2': _uniform(ks[2], (ch, 2 * c), 1.0 / math.sqrt(2.0 * c)),
        'b_mlp2': _uniform(ks[3], (ch,), 1.0 / math.sqrt(2.0 * c)),
        'w_down1': _uniform(ks[4], (c8, c), 1.0 / math.sqrt(c)),
        'w_down2': _uniform(ks[5], (c8, c), 1.0 / math.sqrt(c)),
        'w_up': _uniform(ks[6], (c, c8), 1.0 / math.sqrt(c8)),
        'b_up': _uniform(ks[7], (c,), 1.0 / math.sqrt(c8)),
    }
    i = 8
    for name, dim in (('mlp1', ch), ('mlp2', ch), ('up', c)):
        p[f'bn_{name}_gamma'] = 1.0 + 0.2 * _uniform(ks[i], (dim,), 1.0)
        p[f'bn_{name}_beta'] = 0.1 * _uniform(ks[i + 1], (dim,), 1.0)
        p[f'bn_{name}_mean'] = 0.1 * _uniform(ks[i + 2], (dim,), 1.0)
        p[f'bn_{name}_var'] = 1.0 + 0.3 * _uniform(ks[i + 3], (dim,), 1.0)
        i += 4
    return p


def _bn_affine(p, name):
    scale = p[f'bn_{name}_gamma'] / jnp.sqrt(p[f'bn_{name}_var'] + _BN_EPS)
    bias = p[f'bn_{name}_beta'] - p[f'bn_{name}_mean'] * scale
    return scale, bias


def _prep(params, c):
    """Fold BN (inference affine) + conv biases into channel-major matmul weights.

    conv over cat([nbr - cen, cen]) is decomposed as Wn @ nbr + Wc @ cen + b and
    the two edge convs (xyz / feat) are merged into one block-diagonal weight, so
    the whole edge MLP is one MXU pass over the gathered [3+C, k*tn] slab.
    """
    # TODO(synk): BatchNorm folded with running statistics (inference mode); a
    # PyTorch module in training mode would normalize with batch statistics.
    ch = c // 2
    cin = 3 + c
    cin_p = ((cin + 7) // 8) * 8                 # pad input channels to sublanes
    s1, t1 = _bn_affine(params, 'mlp1')
    s2, t2 = _bn_affine(params, 'mlp2')
    su, tu = _bn_affine(params, 'up')
    w1, w2 = params['w_mlp1'], params['w_mlp2']  # [ch, 6], [ch, 2C]
    wn = jnp.zeros((c, cin_p), jnp.float32)
    wc = jnp.zeros((c, cin_p), jnp.float32)
    wn = wn.at[:ch, :3].set(s1[:, None] * w1[:, :3])
    wn = wn.at[ch:, 3:cin].set(s2[:, None] * w2[:, :c])
    wc = wc.at[:ch, :3].set(s1[:, None] * (w1[:, 3:] - w1[:, :3]))
    wc = wc.at[ch:, 3:cin].set(s2[:, None] * (w2[:, c:] - w2[:, :c]))
    b = jnp.concatenate([s1 * params['b_mlp1'] + t1,
                         s2 * params['b_mlp2'] + t2])[:, None]           # [C, 1]
    wd = jnp.concatenate([params['w_down1'], params['w_down2']], axis=0)  # [2c8, C]
    wu = su[:, None] * params['w_up']                                     # [C, c8]
    bu = (su * params['b_up'] + tu)[:, None]                              # [C, 1]
    return {'wn': wn, 'wc': wc, 'b': b, 'wd': wd, 'wu': wu, 'bu': bu}


# ---------------------------------------------------------------------------
# Forward pass (channel-major end-to-end, no feature/output transposes)
# ---------------------------------------------------------------------------
def local_fuse_forward(params, xyz, features, k, idx=None):
    """local_fuse forward.  xyz: [B, 3, N], features: [B, C, N] -> [B, C, N]."""
    B, _, N = xyz.shape
    C = features.shape[1]
    if idx is None:
        idx = knn_indices(xyz, k)
    q = _prep(params, C)
    cin_p = q['wn'].shape[1]

    tn = 128
    Np = ((N + tn - 1) // tn) * tn              # pad points instead of tn = N
    if Np <= 1024:
        chunk = Np
    else:                                        # gather-chunk over source points
        chunk = next(s for s in (1024, 512, 256, 128) if Np % s == 0)

    # [xyz | feat] concatenated once -> single bf16 gather/MLP source slab.
    xf = jnp.concatenate([xyz.astype(jnp.float32),
                          features.astype(jnp.float32)], axis=1)   # [B, 3+C, N]
    xf = jnp.pad(xf, ((0, 0), (0, cin_p - xf.shape[1]), (0, Np - N)))
    xf_bf = xf.astype(jnp.bfloat16)
    idx_km = jnp.transpose(idx.astype(jnp.int32), (0, 2, 1))       # [B, k, N]
    if Np != N:
        idx_km = jnp.pad(idx_km, ((0, 0), (0, 0), (0, Np - N)))

    fenc, f12 = edge_encode(xf_bf, idx_km, q, k=k, tn=tn, chunk=chunk)

    # The reference's `.mean(...)[0]` indexes batch element 0.
    c8 = C // 8
    chan = jnp.mean(f12[0, :c8, :N], axis=1).reshape(c8, 1)        # [C/8, 1]
    space = jnp.mean(f12[0, c8:, :], axis=0).reshape(1, Np)        # [1, Np]

    out = fuse_final(fenc, f12, chan, space, q['wu'], q['bu'], tn=tn)
    return out[:, :, :N] if Np != N else out


# ---------------------------------------------------------------------------
# Pure-JAX reference (mirrors the PyTorch module op-for-op) for validation
# ---------------------------------------------------------------------------
def local_fuse_reference(params, xyz, features, k, idx):
    x_nm = jnp.transpose(xyz, (0, 2, 1)).astype(jnp.float32)
    f_nm = jnp.transpose(features, (0, 2, 1)).astype(jnp.float32)
    gather = jax.vmap(lambda pts, ii: pts[ii])
    nbr_x, nbr_f = gather(x_nm, idx), gather(f_nm, idx)            # [B, N, k, .]
    cen_x, cen_f = x_nm[:, :, None, :], f_nm[:, :, None, :]
    edge_x = jnp.concatenate([nbr_x - cen_x,
                              jnp.broadcast_to(cen_x, nbr_x.shape)], axis=-1)
    edge_f = jnp.concatenate([nbr_f - cen_f,
                              jnp.broadcast_to(cen_f, nbr_f.shape)], axis=-1)

    def bn(name, v):
        s, b = _bn_affine(params, name)
        return v * s + b

    h1 = jax.nn.relu(bn('mlp1', edge_x @ params['w_mlp1'].T + params['b_mlp1']))
    h2 = jax.nn.relu(bn('mlp2', edge_f @ params['w_mlp2'].T + params['b_mlp2']))
    f_enc = jnp.max(jnp.concatenate([h1, h2], axis=-1), axis=2)    # [B, N, C]
    f1 = jax.nn.relu(f_enc @ params['w_down1'].T)                  # [B, N, C/8]
    f2 = jax.nn.relu(f_enc @ params['w_down2'].T)
    chan = jnp.mean(f1[0], axis=0)        # [C/8]  (batch 0, mean over points)
    space = jnp.mean(f2[0], axis=1)       # [N]    (batch 0, mean over channels)
    fin = jnp.sqrt(chan[None, None, :] * space[None, :, None] + 1e-12)
    fin = fin + f1 + f2
    up = jax.nn.relu(bn('up', fin @ params['w_up'].T + params['b_up']))
    x = f_enc - up
    out_nm = x * jnp.tanh(jax.nn.softplus(x))
    return jnp.transpose(out_nm, (0, 2, 1))


# ---------------------------------------------------------------------------
if __name__ == "__main__":
    B, N, C, K = 2, 128, 32, 16
    key = jax.random.PRNGKey(0)
    kp, kx, kf = jax.random.split(key, 3)
    params = local_fuse_init(kp, C)
    xyz = jax.random.normal(kx, (B, 3, N), jnp.float32)        # [B, 3, N]
    features = jax.random.normal(kf, (B, C, N), jnp.float32)   # [B, C, N]

    idx = knn_indices(xyz, K)                   # Pallas score kernel + XLA top_k
    fwd = jax.jit(local_fuse_forward, static_argnames=("k",))
    out = jax.block_until_ready(fwd(params, xyz, features, k=K, idx=idx))

    assert out.shape == (B, C, N), out.shape
    assert bool(jnp.all(jnp.isfinite(out)))

    # Validate against the pure-JAX reference (same knn indices).  Tolerance
    # absorbs the bf16 gather operands and MXU-vs-XLA f32 matmul differences.
    ref = local_fuse_reference(params, xyz, features, K, idx)
    err = float(jnp.max(jnp.abs(out - ref)))
    assert err < 5e-2, f"max abs err vs reference: {err}"
    print("KERNEL_OK")
</pallas_src>

<mosaic_0001>
module attributes {stable_mosaic.version = 11 : i64} {
  func.func @_knn_score_kernel(%arg0: i32, %arg1: i32, %arg2: memref<1x128x3xf32, #tpu.memory_space<vmem>>, %arg3: memref<1x3x128xf32, #tpu.memory_space<vmem>>, %arg4: memref<1x128x1xf32, #tpu.memory_space<vmem>>, %arg5: memref<1x1x128xf32, #tpu.memory_space<vmem>>, %arg6: memref<1x128x128xf32, #tpu.memory_space<vmem>>) attributes {dimension_semantics = [#tpu.dimension_semantics<parallel>, #tpu.dimension_semantics<arbitrary>], iteration_bounds = array<i64: 2, 1>, scalar_prefetch = 0 : i64, scratch_operands = 0 : i64, tpu.core_type = #tpu.core_type<tc>, window_params = [{transform_indices = @transform_0, window_bounds = array<i64: 1, 128, 3>}, {transform_indices = @transform_1, window_bounds = array<i64: 1, 3, 128>}, {transform_indices = @transform_2, window_bounds = array<i64: 1, 128, 1>}, {transform_indices = @transform_3, window_bounds = array<i64: 1, 1, 128>}, {transform_indices = @transform_4, window_bounds = array<i64: 1, 128, 128>}]} {
    %c0 = arith.constant 0 : index
    %c0_0 = arith.constant 0 : index
    %c0_1 = arith.constant 0 : index
    %0 = vector.load %arg2[%c0, %c0_0, %c0_1] : memref<1x128x3xf32, #tpu.memory_space<vmem>>, vector<1x128x3xf32>
    %1 = vector.shape_cast %0 : vector<1x128x3xf32> to vector<128x3xf32>
    %c0_2 = arith.constant 0 : index
    %c0_3 = arith.constant 0 : index
    %c0_4 = arith.constant 0 : index
    %2 = vector.load %arg3[%c0_2, %c0_3, %c0_4] : memref<1x3x128xf32, #tpu.memory_space<vmem>>, vector<1x3x128xf32>
    %3 = vector.shape_cast %2 : vector<1x3x128xf32> to vector<3x128xf32>
    %4 = vector.extract_strided_slice %1 {offsets = [0, 0], sizes = [128, 1], strides = [1, 1]} : vector<128x3xf32> to vector<128x1xf32>
    %5 = vector.extract_strided_slice %3 {offsets = [0, 0], sizes = [1, 128], strides = [1, 1]} : vector<3x128xf32> to vector<1x128xf32>
    %6 = vector.broadcast %4 : vector<128x1xf32> to vector<128x128xf32>
    %7 = vector.broadcast %5 : vector<1x128xf32> to vector<128x128xf32>
    %8 = arith.mulf %6, %7 : vector<128x128xf32>
    %9 = vector.extract_strided_slice %1 {offsets = [0, 1], sizes = [128, 1], strides = [1, 1]} : vector<128x3xf32> to vector<128x1xf32>
    %10 = vector.extract_strided_slice %3 {offsets = [1, 0], sizes = [1, 128], strides = [1, 1]} : vector<3x128xf32> to vector<1x128xf32>
    %11 = vector.broadcast %9 : vector<128x1xf32> to vector<128x128xf32>
    %12 = vector.broadcast %10 : vector<1x128xf32> to vector<128x128xf32>
    %13 = arith.mulf %11, %12 : vector<128x128xf32>
    %14 = arith.addf %8, %13 : vector<128x128xf32>
    %15 = vector.extract_strided_slice %1 {offsets = [0, 2], sizes = [128, 1], strides = [1, 1]} : vector<128x3xf32> to vector<128x1xf32>
    %16 = vector.extract_strided_slice %3 {offsets = [2, 0], sizes = [1, 128], strides = [1, 1]} : vector<3x128xf32> to vector<1x128xf32>
    %17 = vector.broadcast %15 : vector<128x1xf32> to vector<128x128xf32>
    %18 = vector.broadcast %16 : vector<1x128xf32> to vector<128x128xf32>
    %19 = arith.mulf %17, %18 : vector<128x128xf32>
    %20 = arith.addf %14, %19 : vector<128x128xf32>
    %cst = arith.constant 2.000000e+00 : f32
    %21 = vector.broadcast %cst : f32 to vector<128x128xf32>
    %22 = arith.mulf %21, %20 : vector<128x128xf32>
    %c0_5 = arith.constant 0 : index
    %c0_6 = arith.constant 0 : index
    %c0_7 = arith.constant 0 : index
    %23 = vector.load %arg4[%c0_5, %c0_6, %c0_7] : memref<1x128x1xf32, #tpu.memory_space<vmem>>, vector<1x128x1xf32>
    %24 = vector.shape_cast %23 : vector<1x128x1xf32> to vector<128x1xf32>
    %25 = vector.broadcast %24 : vector<128x1xf32> to vector<128x128xf32>
    %26 = arith.subf %22, %25 : vector<128x128xf32>
    %c0_8 = arith.constant 0 : index
    %c0_9 = arith.constant 0 : index
    %c0_10 = arith.constant 0 : index
    %27 = vector.load %arg5[%c0_8, %c0_9, %c0_10] : memref<1x1x128xf32, #tpu.memory_space<vmem>>, vector<1x1x128xf32>
    %28 = vector.shape_cast %27 : vector<1x1x128xf32> to vector<1x128xf32>
    %29 = vector.broadcast %28 : vector<1x128xf32> to vector<128x128xf32>
    %30 = arith.subf %26, %29 : vector<128x128xf32>
    %c0_11 = arith.constant 0 : index
    %c0_12 = arith.constant 0 : index
    %c0_13 = arith.constant 0 : index
    %31 = vector.load %arg6[%c0_11, %c0_12, %c0_13] : memref<1x128x128xf32, #tpu.memory_space<vmem>>, vector<1x128x128xf32>
    %32 = vector.shape_cast %31 : vector<1x128x128xf32> to vector<128x128xf32>
    %33 = vector.shape_cast %30 : vector<128x128xf32> to vector<1x128x128xf32>
    tpu.vector_store %arg6[%c0_11, %c0_12, %c0_13], %33 {strides = array<i32>} : memref<1x128x128xf32, #tpu.memory_space<vmem>>, vector<1x128x128xf32>,
    return
  }
  func.func @transform_0(%arg0: i32, %arg1: i32) -> (i32, i32, i32) {
    %c0_i32 = arith.constant 0 : i32
    %c0_i32_0 = arith.constant 0 : i32
    return %arg0, %arg1, %c0_i32 : i32, i32, i32
  }
  func.func @transform_1(%arg0: i32, %arg1: i32) -> (i32, i32, i32) {
    %c0_i32 = arith.constant 0 : i32
    %c0_i32_0 = arith.constant 0 : i32
    %c0_i32_1 = arith.constant 0 : i32
    return %arg0, %c0_i32, %c0_i32_0 : i32, i32, i32
  }
  func.func @transform_2(%arg0: i32, %arg1: i32) -> (i32, i32, i32) {
    %c0_i32 = arith.constant 0 : i32
    %c0_i32_0 = arith.constant 0 : i32
    return %arg0, %arg1, %c0_i32 : i32, i32, i32
  }
  func.func @transform_3(%arg0: i32, %arg1: i32) -> (i32, i32, i32) {
    %c0_i32 = arith.constant 0 : i32
    %c0_i32_0 = arith.constant 0 : i32
    %c0_i32_1 = arith.constant 0 : i32
    return %arg0, %c0_i32, %c0_i32_0 : i32, i32, i32
  }
  func.func @transform_4(%arg0: i32, %arg1: i32) -> (i32, i32, i32) {
    %c0_i32 = arith.constant 0 : i32
    %c0_i32_0 = arith.constant 0 : i32
    return %arg0, %arg1, %c0_i32 : i32, i32, i32
  }
}

</mosaic_0001>

<llo_original>
// kernel: tpu_custom_call.1
$region0: #{tpu_custom_call.1}
  #allocation0 [shape = 'u32[]', space=smem, size = 0x4, offset = 0x4, fixed_abs, tag = 'smem constant byte address 0x4 - core index']
  #allocation1 [shape = 'u32[144,128]{1,0:T(1,128)}', space=vmem, size = 0x12000, scoped, tag = 'internal scratch']
  %s0 = inlined_call_operand.vmem [shape: f32[2,128,3], index: 0, kind: input, shape index: {}]
  %s1 = inlined_call_operand.vmem [shape: f32[2,3,128], index: 1, kind: input, shape index: {}]
  %s2 = inlined_call_operand.vmem [shape: f32[2,128,1], index: 2, kind: input, shape index: {}]
  %s3 = inlined_call_operand.vmem [shape: f32[2,1,128], index: 3, kind: input, shape index: {}]
  %s4 = inlined_call_operand.hbm [shape: f32[2,128,128], index: 4, kind: output, shape index: {}]
  %s5 = sld [smem:[#allocation0]]
  $region49: #{tpu_custom_call.1} parent=0
    _
  %s7 = ssub.s32 1, %s5
  %s8 = scalar_select 0, %s7, %s5
  $region1: #{tpu_custom_call.1} parent=0
    #allocation2 [shape = 'u8[131072]{0}', space=vmem, size = 0x20000, scoped, tag = 'output window, operand 0']
    #allocation3 [shape = 's32[2]{0}', space=sflag, size = 0x8, scoped, tag = 'scoped memory for tpu_custom_call.1']
    %9 = vsyncpa [#allocation3], 0
    %s10 = scalar_lea.sflag [#allocation3], 1
    %11 = vsyncpa %s10, 0
    loop: start=0, step=1, limit=4
    $region2: #{tpu_custom_call.1} parent=1 // loop_pre_header
      _
    $region3: #{tpu_custom_call.1} parent=1 // loop_header
      %s13 = sphi 0, %s17
      %p14 = scmp.ge.s32.totalorder %s13, 4
      %s20 = sphi 0, %s32
      %s21 = sphi 0, %s28
      %s22 = sphi 0, %s20
      %s23 = sphi 0, %s21
      %s24 = sphi 0, %s22
      %s25 = sphi 0, %s23
      %s37 = sphi 0, %s39
      %s40 = sphi 0, %s37
      %s41 = sphi 0, %s40
      %s57 = sphi 0, %s41
      %s63 = sphi 0, %s65
      %s66 = sphi 0, %s63
      %s67 = sphi 0, %s66
      %s83 = sphi 0, %s67
      %s91 = sphi 0, %s93
      %s94 = sphi 0, %s91
      %s95 = sphi 0, %s94
      %s111 = sphi 0, %s95
      %s117 = sphi 0, %s119
      %s120 = sphi 0, %s117
      %s121 = sphi 0, %s120
      %s137 = sphi 0, %s121
      %s145 = sphi 0, %s147
      %s148 = sphi 0, %s145
      %s149 = sphi 0, %s148
      %s165 = sphi 0, %s149
    $region4: #{tpu_custom_call.1} parent=1 // loop_header_branch
      %16 = sbr.rel (%p14) target = $region8
    $region5: #{tpu_custom_call.1} parent=1 // loop_body
      %s18 = ssub.s32 %s13, 1
      %s19 = ssub.s32 %s13, 2
      %s26 = sadd.s32 1, %s21
      %p27 = scmp.ge.s32.totalorder %s26, 1
      %s28 = scalar_select %p27, 0, %s26
      %s29 = sadd.s32 1, %s20
      %s30 = scalar_select %p27, %s29, %s20
      %p31 = scmp.ge.s32.totalorder %s30, 2
      %s32 = scalar_select %p31, 0, %s30
      %s33 = ssub.s32 %s20, %s32
      %s34 = ssub.s32 %s21, %s28
      %s35 = sor.u32 %s33, %s34
      %p36 = scmp.eq.s32.totalorder %s35, 0
      %s38 = sadd.s32 %s37, 1
      %s39 = scalar_select %p36, %s37, %s38
      %p42 = pneg %p36
      %p43 = scmp.eq.s32.totalorder %s13, 1
      %p44 = por %p42, %p43
      %p45 = scmp.ne.s32.totalorder %s37, %s40
      %p46 = scmp.eq.s32.totalorder %s13, 0
      %p47 = por %p45, %p46
      %p48 = scmp.ne.s32.totalorder %s37, %s40
      %p49 = scmp.eq.s32.totalorder %s18, 1
      %p50 = por %p48, %p49
      %p51 = scmp.ne.s32.totalorder %s40, %s41
      %p52 = scmp.eq.s32.totalorder %s18, 0
      %p53 = por %p51, %p52
      %p54 = scmp.ne.s32.totalorder %s40, %s41
      %p55 = scmp.eq.s32.totalorder %s19, 1
      %p56 = por %p54, %p55
      %p58 = scmp.ne.s32.totalorder %s41, %s57
      %p59 = scmp.eq.s32.totalorder %s19, 0
      %p60 = por %p58, %p59
      %s61 = ssub.s32 %s20, %s32
      %p62 = scmp.eq.s32.totalorder %s61, 0
      %s64 = sadd.s32 %s63, 1
      %s65 = scalar_select %p62, %s63, %s64
      %p68 = pneg %p62
      %p69 = scmp.eq.s32.totalorder %s13, 1
      %p70 = por %p68, %p69
      %p71 = scmp.ne.s32.totalorder %s63, %s66
      %p72 = scmp.eq.s32.totalorder %s13, 0
      %p73 = por %p71, %p72
      %p74 = scmp.ne.s32.totalorder %s63, %s66
      %p75 = scmp.eq.s32.totalorder %s18, 1
      %p76 = por %p74, %p75
      %p77 = scmp.ne.s32.totalorder %s66, %s67
      %p78 = scmp.eq.s32.totalorder %s18, 0
      %p79 = por %p77, %p78
      %p80 = scmp.ne.s32.totalorder %s66, %s67
      %p81 = scmp.eq.s32.totalorder %s19, 1
      %p82 = por %p80, %p81
      %p84 = scmp.ne.s32.totalorder %s67, %s83
      %p85 = scmp.eq.s32.totalorder %s19, 0
      %p86 = por %p84, %p85
      %s87 = ssub.s32 %s20, %s32
      %s88 = ssub.s32 %s21, %s28
      %s89 = sor.u32 %s87, %s88
      %p90 = scmp.eq.s32.totalorder %s89, 0
      %s92 = sadd.s32 %s91, 1
      %s93 = scalar_select %p90, %s91, %s92
      %p96 = pneg %p90
      %p97 = scmp.eq.s32.totalorder %s13, 1
      %p98 = por %p96, %p97
      %p99 = scmp.ne.s32.totalorder %s91, %s94
      %p100 = scmp.eq.s32.totalorder %s13, 0
      %p101 = por %p99, %p100
      %p102 = scmp.ne.s32.totalorder %s91, %s94
      %p103 = scmp.eq.s32.totalorder %s18, 1
      %p104 = por %p102, %p103
      %p105 = scmp.ne.s32.totalorder %s94, %s95
      %p106 = scmp.eq.s32.totalorder %s18, 0
      %p107 = por %p105, %p106
      %p108 = scmp.ne.s32.totalorder %s94, %s95
      %p109 = scmp.eq.s32.totalorder %s19, 1
      %p110 = por %p108, %p109
      %p112 = scmp.ne.s32.totalorder %s95, %s111
      %p113 = scmp.eq.s32.totalorder %s19, 0
      %p114 = por %p112, %p113
      %s115 = ssub.s32 %s20, %s32
      %p116 = scmp.eq.s32.totalorder %s115, 0
      %s118 = sadd.s32 %s117, 1
      %s119 = scalar_select %p116, %s117, %s118
      %p122 = pneg %p116
      %p123 = scmp.eq.s32.totalorder %s13, 1
      %p124 = por %p122, %p123
      %p125 = scmp.ne.s32.totalorder %s117, %s120
      %p126 = scmp.eq.s32.totalorder %s13, 0
      %p127 = por %p125, %p126
      %p128 = scmp.ne.s32.totalorder %s117, %s120
      %p129 = scmp.eq.s32.totalorder %s18, 1
      %p130 = por %p128, %p129
      %p131 = scmp.ne.s32.totalorder %s120, %s121
      %p132 = scmp.eq.s32.totalorder %s18, 0
      %p133 = por %p131, %p132
      %p134 = scmp.ne.s32.totalorder %s120, %s121
      %p135 = scmp.eq.s32.totalorder %s19, 1
      %p136 = por %p134, %p135
      %p138 = scmp.ne.s32.totalorder %s121, %s137
      %p139 = scmp.eq.s32.totalorder %s19, 0
      %p140 = por %p138, %p139
      %s141 = ssub.s32 %s20, %s32
      %s142 = ssub.s32 %s21, %s28
      %s143 = sor.u32 %s141, %s142
      %p144 = scmp.eq.s32.totalorder %s143, 0
      %s146 = sadd.s32 %s145, 1
      %s147 = scalar_select %p144, %s145, %s146
      %p150 = pneg %p144
      %p151 = scmp.eq.s32.totalorder %s13, 1
      %p152 = por %p150, %p151
      %p153 = scmp.ne.s32.totalorder %s145, %s148
      %p154 = scmp.eq.s32.totalorder %s13, 0
      %p155 = por %p153, %p154
      %p156 = scmp.ne.s32.totalorder %s145, %s148
      %p157 = scmp.eq.s32.totalorder %s18, 1
      %p158 = por %p156, %p157
      %p159 = scmp.ne.s32.totalorder %s148, %s149
      %p160 = scmp.eq.s32.totalorder %s18, 0
      %p161 = por %p159, %p160
      %p162 = scmp.ne.s32.totalorder %s148, %s149
      %p163 = scmp.eq.s32.totalorder %s19, 1
      %p164 = por %p162, %p163
      %p166 = scmp.ne.s32.totalorder %s149, %s165
      %p167 = scmp.eq.s32.totalorder %s19, 0
      %p168 = por %p166, %p167
      %p169 = scmp.le.s32.totalorder 1, %s13
      %p170 = scmp.lt.s32.totalorder %s13, 3
      %p171 = pnand %p169, %p170
      %p172 = pneg %p171
      // Predicated region
      $region9: #{tpu_custom_call.1} parent=5 // pred_check
        _
      $region10: #{tpu_custom_call.1} parent=5 // pred_check_branch
        %174 = sbr.rel (%p171) target = $region12
      $region11: #{tpu_custom_call.1} parent=5 // pred_region
        %s175 = ssub.s32 %s13, 1
      $region12: #{tpu_custom_call.1} parent=5 // pred_fallthru
        _
      %p176 = scmp.lt.s32.totalorder %s13, 2
      // Predicated region
      $region13: #{tpu_custom_call.1} parent=5 // pred_check
        %p177 = pneg %p176
      $region14: #{tpu_custom_call.1} parent=5 // pred_check_branch
        %179 = sbr.rel (%p177) target = $region16
      $region15: #{tpu_custom_call.1} parent=5 // pred_region
        // Predicated region
        $region17: #{tpu_custom_call.1} parent=15 // pred_check
          %p180 = pneg %p47
        $region18: #{tpu_custom_call.1} parent=15 // pred_check_branch
          %182 = sbr.rel (%p180) target = $region20
        $region19: #{tpu_custom_call.1} parent=15 // pred_region
          %s183 = smul.u32 16, %s21
          %p184 = scmp.lt.s32.totalorder %s20, 1
          %s185 = scalar_select %p184, %s20, 1
          %p186 = scmp.lt.s32.totalorder %s183, 15
          %s187 = scalar_select %p186, %s183, 15
          %s188 = smul.addr %s185, 16
          %s189 = sadd.s32 %s187, %s188
          %s190 = smul.addr %s189, 8
          %s191 = scalar_lea.vmem %s0, %s190
          %s192 = smul.u32 16, %s21
        $region20: #{tpu_custom_call.1} parent=15 // pred_fallthru
          _
        // Predicated region
        $region21: #{tpu_custom_call.1} parent=15 // pred_check
          %p193 = pneg %p73
        $region22: #{tpu_custom_call.1} parent=15 // pred_check_branch
          %195 = sbr.rel (%p193) target = $region24
        $region23: #{tpu_custom_call.1} parent=15 // pred_region
          %p196 = scmp.lt.s32.totalorder %s20, 1
          %s197 = scalar_select %p196, %s20, 1
          %s198 = smul.addr %s197, 4
          %s199 = scalar_lea.vmem %s1, %s198
        $region24: #{tpu_custom_call.1} parent=15 // pred_fallthru
          _
        // Predicated region
        $region25: #{tpu_custom_call.1} parent=15 // pred_check
          %p200 = pneg %p101
        $region26: #{tpu_custom_call.1} parent=15 // pred_check_branch
          %202 = sbr.rel (%p200) target = $region28
        $region27: #{tpu_custom_call.1} parent=15 // pred_region
          %s203 = smul.u32 16, %s21
          %p204 = scmp.lt.s32.totalorder %s20, 1
          %s205 = scalar_select %p204, %s20, 1
          %p206 = scmp.lt.s32.totalorder %s203, 15
          %s207 = scalar_select %p206, %s203, 15
          %s208 = smul.addr %s205, 16
          %s209 = sadd.s32 %s207, %s208
          %s210 = smul.addr %s209, 8
          %s211 = scalar_lea.vmem %s2, %s210
          %s212 = smul.u32 16, %s21
        $region28: #{tpu_custom_call.1} parent=15 // pred_fallthru
          _
        // Predicated region
        $region29: #{tpu_custom_call.1} parent=15 // pred_check
          %p213 = pneg %p127
        $region30: #{tpu_custom_call.1} parent=15 // pred_check_branch
          %215 = sbr.rel (%p213) target = $region32
        $region31: #{tpu_custom_call.1} parent=15 // pred_region
          %p216 = scmp.lt.s32.totalorder %s20, 1
          %s217 = scalar_select %p216, %s20, 1
          %s218 = scalar_lea.vmem %s3, %s217
        $region32: #{tpu_custom_call.1} parent=15 // pred_fallthru
          _
      $region16: #{tpu_custom_call.1} parent=5 // pred_fallthru
        _
      %p219 = scmp.le.s32.totalorder 1, %s13
      %p220 = scmp.lt.s32.totalorder %s13, 3
      %p221 = pnand %p219, %p220
      %p222 = pneg %p221
      // Predicated region
      $region33: #{tpu_custom_call.1} parent=5 // pred_check
        _
      $region34: #{tpu_custom_call.1} parent=5 // pred_check_branch
        %224 = sbr.rel (%p221) target = $region36
      $region35: #{tpu_custom_call.1} parent=5 // pred_region
        %s225 = ssub.s32 %s13, 1
        %s226 = smul.u32 16, %s23
        %p227 = scmp.lt.s32.totalorder %s22, 1
        %s228 = scalar_select %p227, %s22, 1
        %p229 = scmp.lt.s32.totalorder %s226, 15
        %s230 = scalar_select %p229, %s226, 15
        %s231 = smul.addr %s228, 16
        %s232 = sadd.s32 %s230, %s231
        %s233 = smul.addr %s232, 8
        %s234 = scalar_lea.vmem %s0, %s233
        %p235 = pneg %p53
        %p236 = pneg %p50
        %p237 = scmp.lt.s32.totalorder %s22, 1
        %s238 = scalar_select %p237, %s22, 1
        %s239 = smul.addr %s238, 4
        %s240 = scalar_lea.vmem %s1, %s239
        %p241 = pneg %p79
        %p242 = pneg %p76
        %s243 = smul.u32 16, %s23
        %p244 = scmp.lt.s32.totalorder %s22, 1
        %s245 = scalar_select %p244, %s22, 1
        %p246 = scmp.lt.s32.totalorder %s243, 15
        %s247 = scalar_select %p246, %s243, 15
        %s248 = smul.addr %s245, 16
        %s249 = sadd.s32 %s247, %s248
        %s250 = smul.addr %s249, 8
        %s251 = scalar_lea.vmem %s2, %s250
        %p252 = pneg %p107
        %p253 = pneg %p104
        %p254 = scmp.lt.s32.totalorder %s22, 1
        %s255 = scalar_select %p254, %s22, 1
        %s256 = scalar_lea.vmem %s3, %s255
        %p257 = pneg %p133
        %p258 = pneg %p130
        %p259 = pneg %p161
        %p260 = pneg %p158
        %s261 = sand.u32 %s148, 1
        %s262 = scalar_lea.sflag [#allocation3], %s261
        %s263 = sand.u32 %s148, 1
        %s264 = smul.addr %s263, 128
        %s265 = scalar_lea.vmem [#allocation2], %s264
        %s266 = smul.u32 16, %s23
        %p267 = scmp.lt.s32.totalorder %s22, 1
        %s268 = scalar_select %p267, %s22, 1
        %p269 = scmp.lt.s32.totalorder %s266, 15
        %s270 = scalar_select %p269, %s266, 15
        %s271 = smul.addr %s268, 16
        %s272 = sadd.s32 %s270, %s271
        %s273 = smul.addr %s272, 8
        %s274 = scalar_lea.vmem %s0, %s273
        %s275 = smul.u32 16, %s23
        %p276 = scmp.lt.s32.totalorder %s22, 1
        %s277 = scalar_select %p276, %s22, 1
        %s278 = smul.addr %s277, 4
        %s279 = scalar_lea.vmem %s1, %s278
        %s280 = smul.u32 16, %s23
        %p281 = scmp.lt.s32.totalorder %s22, 1
        %s282 = scalar_select %p281, %s22, 1
        %p283 = scmp.lt.s32.totalorder %s280, 15
        %s284 = scalar_select %p283, %s280, 15
        %s285 = smul.addr %s282, 16
        %s286 = sadd.s32 %s284, %s285
        %s287 = smul.addr %s286, 8
        %s288 = scalar_lea.vmem %s2, %s287
        %s289 = smul.u32 16, %s23
        %p290 = scmp.lt.s32.totalorder %s22, 1
        %s291 = scalar_select %p290, %s22, 1
        %s292 = scalar_lea.vmem %s3, %s291
        %s293 = smul.u32 16, %s23
        %v294 = vld [vmem:[%s274] sm:$0xff]
        %v295 = vld [vmem:[%s274 + $0x8] sm:$0xff]
        %v296 = vld [vmem:[%s274 + $0x10] sm:$0xff]
        %v297 = vld [vmem:[%s274 + $0x18] sm:$0xff]
        %v298 = vld [vmem:[%s274 + $0x20] sm:$0xff]
        %v299 = vld [vmem:[%s274 + $0x28] sm:$0xff]
        %v300 = vld [vmem:[%s274 + $0x30] sm:$0xff]
        %v301 = vld [vmem:[%s274 + $0x38] sm:$0xff]
        %v302 = vld [vmem:[%s274 + $0x40] sm:$0xff]
        %v303 = vld [vmem:[%s274 + $0x48] sm:$0xff]
        %v304 = vld [vmem:[%s274 + $0x50] sm:$0xff]
        %v305 = vld [vmem:[%s274 + $0x58] sm:$0xff]
        %v306 = vld [vmem:[%s274 + $0x60] sm:$0xff]
        %v307 = vld [vmem:[%s274 + $0x68] sm:$0xff]
        %v308 = vld [vmem:[%s274 + $0x70] sm:$0xff]
        %v309 = vld [vmem:[%s274 + $0x78] sm:$0xff]
        %v310 = vld [vmem:[%s279] sm:$0x7]
        %312 = vset.pattern.permute.xlu0 0
        %313 = vperm.xlu0 %312, %v294
        %v314 = vpop.permute.xlu0 %313
        %317 = vset.pattern.permute.xlu0 0
        %318 = vperm.xlu0 %317, %v295
        %v319 = vpop.permute.xlu0 %318
        %322 = vset.pattern.permute.xlu0 0
        %323 = vperm.xlu0 %322, %v296
        %v324 = vpop.permute.xlu0 %323
        %327 = vset.pattern.permute.xlu0 0
        %328 = vperm.xlu0 %327, %v297
        %v329 = vpop.permute.xlu0 %328
        %332 = vset.pattern.permute.xlu0 0
        %333 = vperm.xlu0 %332, %v298
        %v334 = vpop.permute.xlu0 %333
        %337 = vset.pattern.permute.xlu0 0
        %338 = vperm.xlu0 %337, %v299
        %v339 = vpop.permute.xlu0 %338
        %342 = vset.pattern.permute.xlu0 0
        %343 = vperm.xlu0 %342, %v300
        %v344 = vpop.permute.xlu0 %343
        %347 = vset.pattern.permute.xlu0 0
        %348 = vperm.xlu0 %347, %v301
        %v349 = vpop.permute.xlu0 %348
        %352 = vset.pattern.permute.xlu0 0
        %353 = vperm.xlu0 %352, %v302
        %v354 = vpop.permute.xlu0 %353
        %357 = vset.pattern.permute.xlu0 0
        %358 = vperm.xlu0 %357, %v303
        %v359 = vpop.permute.xlu0 %358
        %362 = vset.pattern.permute.xlu0 0
        %363 = vperm.xlu0 %362, %v304
        %v364 = vpop.permute.xlu0 %363
        %367 = vset.pattern.permute.xlu0 0
        %368 = vperm.xlu0 %367, %v305
        %v369 = vpop.permute.xlu0 %368
        %372 = vset.pattern.permute.xlu0 0
        %373 = vperm.xlu0 %372, %v306
        %v374 = vpop.permute.xlu0 %373
        %377 = vset.pattern.permute.xlu0 0
        %378 = vperm.xlu0 %377, %v307
        %v379 = vpop.permute.xlu0 %378
        %382 = vset.pattern.permute.xlu0 0
        %383 = vperm.xlu0 %382, %v308
        %v384 = vpop.permute.xlu0 %383
        %387 = vset.pattern.permute.xlu0 0
        %388 = vperm.xlu0 %387, %v309
        %v389 = vpop.permute.xlu0 %388
        %v391 = vlaneseq
        %v392 = vshrl.u32 %v391, 7
        %v393 = vsub.s32 0, %v392
        %v394 = vrot.slane %v310, %v393
        %v395 = vmul.f32 %v314, %v394
        %v396 = vmul.f32 %v319, %v394
        %v397 = vmul.f32 %v324, %v394
        %v398 = vmul.f32 %v329, %v394
        %v399 = vmul.f32 %v334, %v394
        %v400 = vmul.f32 %v339, %v394
        %v401 = vmul.f32 %v344, %v394
        %v402 = vmul.f32 %v349, %v394
        %v403 = vmul.f32 %v354, %v394
        %v404 = vmul.f32 %v359, %v394
        %v405 = vmul.f32 %v364, %v394
        %v406 = vmul.f32 %v369, %v394
        %v407 = vmul.f32 %v374, %v394
        %v408 = vmul.f32 %v379, %v394
        %v409 = vmul.f32 %v384, %v394
        %v410 = vmul.f32 %v389, %v394
        %411 = vset.pattern.permute.xlu0 1
        %412 = vperm.xlu0 %411, %v294
        %v413 = vpop.permute.xlu0 %412
        %415 = vset.pattern.permute.xlu0 1
        %416 = vperm.xlu0 %415, %v295
        %v417 = vpop.permute.xlu0 %416
        %419 = vset.pattern.permute.xlu0 1
        %420 = vperm.xlu0 %419, %v296
        %v421 = vpop.permute.xlu0 %420
        %423 = vset.pattern.permute.xlu0 1
        %424 = vperm.xlu0 %423, %v297
        %v425 = vpop.permute.xlu0 %424
        %427 = vset.pattern.permute.xlu0 1
        %428 = vperm.xlu0 %427, %v298
        %v429 = vpop.permute.xlu0 %428
        %431 = vset.pattern.permute.xlu0 1
        %432 = vperm.xlu0 %431, %v299
        %v433 = vpop.permute.xlu0 %432
        %435 = vset.pattern.permute.xlu0 1
        %436 = vperm.xlu0 %435, %v300
        %v437 = vpop.permute.xlu0 %436
        %439 = vset.pattern.permute.xlu0 1
        %440 = vperm.xlu0 %439, %v301
        %v441 = vpop.permute.xlu0 %440
        %443 = vset.pattern.permute.xlu0 1
        %444 = vperm.xlu0 %443, %v302
        %v445 = vpop.permute.xlu0 %444
        %447 = vset.pattern.permute.xlu0 1
        %448 = vperm.xlu0 %447, %v303
        %v449 = vpop.permute.xlu0 %448
        %451 = vset.pattern.permute.xlu0 1
        %452 = vperm.xlu0 %451, %v304
        %v453 = vpop.permute.xlu0 %452
        %455 = vset.pattern.permute.xlu0 1
        %456 = vperm.xlu0 %455, %v305
        %v457 = vpop.permute.xlu0 %456
        %459 = vset.pattern.permute.xlu0 1
        %460 = vperm.xlu0 %459, %v306
        %v461 = vpop.permute.xlu0 %460
        %463 = vset.pattern.permute.xlu0 1
        %464 = vperm.xlu0 %463, %v307
        %v465 = vpop.permute.xlu0 %464
        %467 = vset.pattern.permute.xlu0 1
        %468 = vperm.xlu0 %467, %v308
        %v469 = vpop.permute.xlu0 %468
        %471 = vset.pattern.permute.xlu0 1
        %472 = vperm.xlu0 %471, %v309
        %v473 = vpop.permute.xlu0 %472
        %v475 = vlaneseq
        %v476 = vshrl.u32 %v475, 7
        %v477 = vsub.s32 1, %v476
        %v478 = vrot.slane %v310, %v477
        %v479 = vmul.f32 %v413, %v478
        %v480 = vmul.f32 %v417, %v478
        %v481 = vmul.f32 %v421, %v478
        %v482 = vmul.f32 %v425, %v478
        %v483 = vmul.f32 %v429, %v478
        %v484 = vmul.f32 %v433, %v478
        %v485 = vmul.f32 %v437, %v478
        %v486 = vmul.f32 %v441, %v478
        %v487 = vmul.f32 %v445, %v478
        %v488 = vmul.f32 %v449, %v478
        %v489 = vmul.f32 %v453, %v478
        %v490 = vmul.f32 %v457, %v478
        %v491 = vmul.f32 %v461, %v478
        %v492 = vmul.f32 %v465, %v478
        %v493 = vmul.f32 %v469, %v478
        %v494 = vmul.f32 %v473, %v478
        %v495 = vadd.f32 %v395, %v479
        %v496 = vadd.f32 %v396, %v480
        %v497 = vadd.f32 %v397, %v481
        %v498 = vadd.f32 %v398, %v482
        %v499 = vadd.f32 %v399, %v483
        %v500 = vadd.f32 %v400, %v484
        %v501 = vadd.f32 %v401, %v485
        %v502 = vadd.f32 %v402, %v486
        %v503 = vadd.f32 %v403, %v487
        %v504 = vadd.f32 %v404, %v488
        %v505 = vadd.f32 %v405, %v489
        %v506 = vadd.f32 %v406, %v490
        %v507 = vadd.f32 %v407, %v491
        %v508 = vadd.f32 %v408, %v492
        %v509 = vadd.f32 %v409, %v493
        %v510 = vadd.f32 %v410, %v494
        %511 = vset.pattern.permute.xlu0 2
        %512 = vperm.xlu0 %511, %v294
        %v513 = vpop.permute.xlu0 %512
        %515 = vset.pattern.permute.xlu0 2
        %516 = vperm.xlu0 %515, %v295
        %v517 = vpop.permute.xlu0 %516
        %519 = vset.pattern.permute.xlu0 2
        %520 = vperm.xlu0 %519, %v296
        %v521 = vpop.permute.xlu0 %520
        %523 = vset.pattern.permute.xlu0 2
        %524 = vperm.xlu0 %523, %v297
        %v525 = vpop.permute.xlu0 %524
        %527 = vset.pattern.permute.xlu0 2
        %528 = vperm.xlu0 %527, %v298
        %v529 = vpop.permute.xlu0 %528
        %531 = vset.pattern.permute.xlu0 2
        %532 = vperm.xlu0 %531, %v299
        %v533 = vpop.permute.xlu0 %532
        %535 = vset.pattern.permute.xlu0 2
        %536 = vperm.xlu0 %535, %v300
        %v537 = vpop.permute.xlu0 %536
        %539 = vset.pattern.permute.xlu0 2
        %540 = vperm.xlu0 %539, %v301
        %v541 = vpop.permute.xlu0 %540
        %543 = vset.pattern.permute.xlu0 2
        %544 = vperm.xlu0 %543, %v302
        %v545 = vpop.permute.xlu0 %544
        %547 = vset.pattern.permute.xlu0 2
        %548 = vperm.xlu0 %547, %v303
        %v549 = vpop.permute.xlu0 %548
        %551 = vset.pattern.permute.xlu0 2
        %552 = vperm.xlu0 %551, %v304
        %v553 = vpop.permute.xlu0 %552
        %555 = vset.pattern.permute.xlu0 2
        %556 = vperm.xlu0 %555, %v305
        %v557 = vpop.permute.xlu0 %556
        %559 = vset.pattern.permute.xlu0 2
        %560 = vperm.xlu0 %559, %v306
        %v561 = vpop.permute.xlu0 %560
        %563 = vset.pattern.permute.xlu0 2
        %564 = vperm.xlu0 %563, %v307
        %v565 = vpop.permute.xlu0 %564
        %567 = vset.pattern.permute.xlu0 2
        %568 = vperm.xlu0 %567, %v308
        %v569 = vpop.permute.xlu0 %568
        %571 = vset.pattern.permute.xlu0 2
        %572 = vperm.xlu0 %571, %v309
        %v573 = vpop.permute.xlu0 %572
        %v575 = vlaneseq
        %v576 = vshrl.u32 %v575, 7
        %v577 = vsub.s32 2, %v576
        %v578 = vrot.slane %v310, %v577
        %v579 = vmul.f32 %v513, %v578
        %v580 = vmul.f32 %v517, %v578
        %v581 = vmul.f32 %v521, %v578
        %v582 = vmul.f32 %v525, %v578
        %v583 = vmul.f32 %v529, %v578
        %v584 = vmul.f32 %v533, %v578
        %v585 = vmul.f32 %v537, %v578
        %v586 = vmul.f32 %v541, %v578
        %v587 = vmul.f32 %v545, %v578
        %v588 = vmul.f32 %v549, %v578
        %v589 = vmul.f32 %v553, %v578
        %v590 = vmul.f32 %v557, %v578
        %v591 = vmul.f32 %v561, %v578
        %v592 = vmul.f32 %v565, %v578
        %v593 = vmul.f32 %v569, %v578
        %v594 = vmul.f32 %v573, %v578
        %v595 = vadd.f32 %v495, %v579
        %v596 = vadd.f32 %v496, %v580
        %v597 = vadd.f32 %v497, %v581
        %v598 = vadd.f32 %v498, %v582
        %v599 = vadd.f32 %v499, %v583
        %v600 = vadd.f32 %v500, %v584
        %v601 = vadd.f32 %v501, %v585
        %v602 = vadd.f32 %v502, %v586
        %v603 = vadd.f32 %v503, %v587
        %v604 = vadd.f32 %v504, %v588
        %v605 = vadd.f32 %v505, %v589
        %v606 = vadd.f32 %v506, %v590
        %v607 = vadd.f32 %v507, %v591
        %v608 = vadd.f32 %v508, %v592
        %v609 = vadd.f32 %v509, %v593
        %v610 = vadd.f32 %v510, %v594
        %v611 = vmul.f32 %v595, 2.0
        %v612 = vmul.f32 %v596, 2.0
        %v613 = vmul.f32 %v597, 2.0
        %v614 = vmul.f32 %v598, 2.0
        %v615 = vmul.f32 %v599, 2.0
        %v616 = vmul.f32 %v600, 2.0
        %v617 = vmul.f32 %v601, 2.0
        %v618 = vmul.f32 %v602, 2.0
        %v619 = vmul.f32 %v603, 2.0
        %v620 = vmul.f32 %v604, 2.0
        %v621 = vmul.f32 %v605, 2.0
        %v622 = vmul.f32 %v606, 2.0
        %v623 = vmul.f32 %v607, 2.0
        %v624 = vmul.f32 %v608, 2.0
        %v625 = vmul.f32 %v609, 2.0
        %v626 = vmul.f32 %v610, 2.0
        %v627 = vld [vmem:[%s288] sm:$0xff]
        %v628 = vld [vmem:[%s288 + $0x8] sm:$0xff]
        %v629 = vld [vmem:[%s288 + $0x10] sm:$0xff]
        %v630 = vld [vmem:[%s288 + $0x18] sm:$0xff]
        %v631 = vld [vmem:[%s288 + $0x20] sm:$0xff]
        %v632 = vld [vmem:[%s288 + $0x28] sm:$0xff]
        %v633 = vld [vmem:[%s288 + $0x30] sm:$0xff]
        %v634 = vld [vmem:[%s288 + $0x38] sm:$0xff]
        %v635 = vld [vmem:[%s288 + $0x40] sm:$0xff]
        %v636 = vld [vmem:[%s288 + $0x48] sm:$0xff]
        %v637 = vld [vmem:[%s288 + $0x50] sm:$0xff]
        %v638 = vld [vmem:[%s288 + $0x58] sm:$0xff]
        %v639 = vld [vmem:[%s288 + $0x60] sm:$0xff]
        %v640 = vld [vmem:[%s288 + $0x68] sm:$0xff]
        %v641 = vld [vmem:[%s288 + $0x70] sm:$0xff]
        %v642 = vld [vmem:[%s288 + $0x78] sm:$0xff]
        %644 = vset.pattern.permute.xlu0 0
        %645 = vperm.xlu0 %644, %v627
        %v646 = vpop.permute.xlu0 %645
        %649 = vset.pattern.permute.xlu0 0
        %650 = vperm.xlu0 %649, %v628
        %v651 = vpop.permute.xlu0 %650
        %654 = vset.pattern.permute.xlu0 0
        %655 = vperm.xlu0 %654, %v629
        %v656 = vpop.permute.xlu0 %655
        %659 = vset.pattern.permute.xlu0 0
        %660 = vperm.xlu0 %659, %v630
        %v661 = vpop.permute.xlu0 %660
        %664 = vset.pattern.permute.xlu0 0
        %665 = vperm.xlu0 %664, %v631
        %v666 = vpop.permute.xlu0 %665
        %669 = vset.pattern.permute.xlu0 0
        %670 = vperm.xlu0 %669, %v632
        %v671 = vpop.permute.xlu0 %670
        %674 = vset.pattern.permute.xlu0 0
        %675 = vperm.xlu0 %674, %v633
        %v676 = vpop.permute.xlu0 %675
        %679 = vset.pattern.permute.xlu0 0
        %680 = vperm.xlu0 %679, %v634
        %v681 = vpop.permute.xlu0 %680
        %684 = vset.pattern.permute.xlu0 0
        %685 = vperm.xlu0 %684, %v635
        %v686 = vpop.permute.xlu0 %685
        %689 = vset.pattern.permute.xlu0 0
        %690 = vperm.xlu0 %689, %v636
        %v691 = vpop.permute.xlu0 %690
        %694 = vset.pattern.permute.xlu0 0
        %695 = vperm.xlu0 %694, %v637
        %v696 = vpop.permute.xlu0 %695
        %699 = vset.pattern.permute.xlu0 0
        %700 = vperm.xlu0 %699, %v638
        %v701 = vpop.permute.xlu0 %700
        %704 = vset.pattern.permute.xlu0 0
        %705 = vperm.xlu0 %704, %v639
        %v706 = vpop.permute.xlu0 %705
        %709 = vset.pattern.permute.xlu0 0
        %710 = vperm.xlu0 %709, %v640
        %v711 = vpop.permute.xlu0 %710
        %714 = vset.pattern.permute.xlu0 0
        %715 = vperm.xlu0 %714, %v641
        %v716 = vpop.permute.xlu0 %715
        %719 = vset.pattern.permute.xlu0 0
        %720 = vperm.xlu0 %719, %v642
        %v721 = vpop.permute.xlu0 %720
        %v723 = vsub.f32 %v611, %v646
        %v724 = vsub.f32 %v612, %v651
        %v725 = vsub.f32 %v613, %v656
        %v726 = vsub.f32 %v614, %v661
        %v727 = vsub.f32 %v615, %v666
        %v728 = vsub.f32 %v616, %v671
        %v729 = vsub.f32 %v617, %v676
        %v730 = vsub.f32 %v618, %v681
        %v731 = vsub.f32 %v619, %v686
        %v732 = vsub.f32 %v620, %v691
        %v733 = vsub.f32 %v621, %v696
        %v734 = vsub.f32 %v622, %v701
        %v735 = vsub.f32 %v623, %v706
        %v736 = vsub.f32 %v624, %v711
        %v737 = vsub.f32 %v625, %v716
        %v738 = vsub.f32 %v626, %v721
        %v739 = vld [vmem:[%s292] sm:$0x1]
        %v741 = vlaneseq
        %v742 = vshrl.u32 %v741, 7
        %v743 = vsub.s32 0, %v742
        %v744 = vrot.slane %v739, %v743
        %v746 = vsub.f32 %v723, %v744
        %v747 = vsub.f32 %v724, %v744
        %v748 = vsub.f32 %v725, %v744
        %v749 = vsub.f32 %v726, %v744
        %v750 = vsub.f32 %v727, %v744
        %v751 = vsub.f32 %v728, %v744
        %v752 = vsub.f32 %v729, %v744
        %v753 = vsub.f32 %v730, %v744
        %v754 = vsub.f32 %v731, %v744
        %v755 = vsub.f32 %v732, %v744
        %v756 = vsub.f32 %v733, %v744
        %v757 = vsub.f32 %v734, %v744
        %v758 = vsub.f32 %v735, %v744
        %v759 = vsub.f32 %v736, %v744
        %v760 = vsub.f32 %v737, %v744
        %v761 = vsub.f32 %v738, %v744
        %762 = vst [vmem:[%s265] sm:$0xff] %v746
        %763 = vst [vmem:[%s265 + $0x8] sm:$0xff] %v747
        %764 = vst [vmem:[%s265 + $0x10] sm:$0xff] %v748
        %765 = vst [vmem:[%s265 + $0x18] sm:$0xff] %v749
        %766 = vst [vmem:[%s265 + $0x20] sm:$0xff] %v750
        %767 = vst [vmem:[%s265 + $0x28] sm:$0xff] %v751
        %768 = vst [vmem:[%s265 + $0x30] sm:$0xff] %v752
        %769 = vst [vmem:[%s265 + $0x38] sm:$0xff] %v753
        %770 = vst [vmem:[%s265 + $0x40] sm:$0xff] %v754
        %771 = vst [vmem:[%s265 + $0x48] sm:$0xff] %v755
        %772 = vst [vmem:[%s265 + $0x50] sm:$0xff] %v756
        %773 = vst [vmem:[%s265 + $0x58] sm:$0xff] %v757
        %774 = vst [vmem:[%s265 + $0x60] sm:$0xff] %v758
        %775 = vst [vmem:[%s265 + $0x68] sm:$0xff] %v759
        %776 = vst [vmem:[%s265 + $0x70] sm:$0xff] %v760
        %777 = vst [vmem:[%s265 + $0x78] sm:$0xff] %v761
        %s778 = sand.u32 %s148, 1
        %s779 = scalar_lea.sflag [#allocation3], %s778
        %s780 = sand.u32 %s148, 1
        %s781 = smul.addr %s780, 128
        %s782 = scalar_lea.vmem [#allocation2], %s781
        // Predicated region
        $region37: #{tpu_custom_call.1} parent=35 // pred_check
          %p783 = pneg %p158
        $region38: #{tpu_custom_call.1} parent=35 // pred_check_branch
          %785 = sbr.rel (%p783) target = $region40
        $region39: #{tpu_custom_call.1} parent=35 // pred_region
          %s786 = smul.u32 16, %s23
          %s788 = ssub.s32 2048, 2048
          %789 = vsyncadd %s779, %s788
          %s790 = smul.addr %s22, 16
          %s791 = sadd.s32 %s786, %s790
          %s792 = smul.addr %s791, 128
          %s793 = scalar_lea.hbm %s4, %s792
          %s794 = sshll.u32 %s782, 4
          %s795 = int_to_ptr.vmem [resolvable:$true] %s794
          %800 = dma.vmem_to_hbm [thread:$0]  %s795, 2048, %s793, %s779, 128, 128, 8
        $region40: #{tpu_custom_call.1} parent=35 // pred_fallthru
          _
      $region36: #{tpu_custom_call.1} parent=5 // pred_fallthru
        _
      %p801 = scmp.le.s32.totalorder 2, %s13
      // Predicated region
      $region41: #{tpu_custom_call.1} parent=5 // pred_check
        %p802 = pneg %p801
      $region42: #{tpu_custom_call.1} parent=5 // pred_check_branch
        %804 = sbr.rel (%p802) target = $region44
      $region43: #{tpu_custom_call.1} parent=5 // pred_region
        %s805 = ssub.s32 %s13, 2
        // Predicated region
        $region45: #{tpu_custom_call.1} parent=43 // pred_check
          %p806 = pneg %p164
        $region46: #{tpu_custom_call.1} parent=43 // pred_check_branch
          %808 = sbr.rel (%p806) target = $region48
        $region47: #{tpu_custom_call.1} parent=43 // pred_region
          %s809 = sand.u32 %s149, 1
          %s810 = scalar_lea.sflag [#allocation3], %s809
          %s811 = sand.u32 %s149, 1
          %s812 = smul.addr %s811, 128
          %s813 = scalar_lea.vmem [#allocation2], %s812
          %814 = dma.done %s810, 2048
        $region48: #{tpu_custom_call.1} parent=43 // pred_fallthru
          _
      $region44: #{tpu_custom_call.1} parent=5 // pred_fallthru
        _
    $region6: #{tpu_custom_call.1} parent=1 // loop_footer
      %s17 = sadd.s32 1, %s13
    $region7: #{tpu_custom_call.1} parent=1 // loop_footer_branch
      %12 = sbr.rel target = $region3
    $region8: #{tpu_custom_call.1} parent=1 // loop_exit
      _
    %815 = vsyncpa [#allocation3], 1
    %s816 = scalar_lea.sflag [#allocation3], 1
    %817 = vsyncpa %s816, 1

</llo_original>
